<compile_context>
chip_gen: v7x
topology: tpu7x:2x2x1
jax: 0.10.0
libtpu: 0.0.40
codegen_flags: <defaults>
</compile_context>

<pallas_src>
import jax
import jax.numpy as jnp
from jax.experimental import pallas as pl
from jax.experimental.pallas import tpu as pltpu


def _round_up(v, m):
    return (v + m - 1) // m * m


def _vmem_limit_bytes():
    """Generation-aware scoped-VMEM limit (<= 3/4 physical, capped at 100 MiB)."""
    try:
        cap = int(pltpu.get_tpu_info().vmem_capacity_bytes)
    except Exception:
        cap = 64 * 1024 * 1024          # conservative fallback (v7x-sized)
    return max(32 * 1024 * 1024, min(cap * 3 // 4, 100 * 1024 * 1024))


def downsampling_block(x, w, b, gamma, beta, *, compute_dtype=jnp.bfloat16, tile_l=2048):
    """x: (N, C_in, L) f32; w: (C_out, C_in, 7) PyTorch Conv1d layout; b/gamma/beta: (C_out,).

    Returns (N, C_out, L_out) f32, matching DownsamplingBlock.forward in train mode.
    """
    N, C_in, L = x.shape
    C_out = w.shape[0]
    k_size, stride, pad = 7, 4, 3
    L_out = (L + 2 * pad - k_size) // stride + 1

    K4 = stride * C_in                    # polyphase contraction dim (4 phases x C_in)
    K4p = _round_up(K4, 16)               # bf16 sublane-pack friendly
    C_out_p = _round_up(C_out, 8)         # f32 sublane friendly channel dim
    isz = jnp.dtype(compute_dtype).itemsize

    vmem_limit = _vmem_limit_bytes()
    budget = vmem_limit // 2              # per-step working-set budget (double buffers incl.)

    # ---- pick the L_out tile: as large as possible, multiple of 128, within budget ----
    tile_l = max(128, (tile_l // 128) * 128)

    def _step_bytes(tl):
        return (2 * K4p * tl * isz                 # xa tile (double buffered)
                + 2 * C_out * tl * 4               # output tile (double buffered, pass 2)
                + 4 * C_out_p * tl * 4             # in-kernel f32 temporaries (z / y)
                + 4 * C_out_p * K4p * isz          # resident stacked weights
                + (1 << 20))                       # slack

    TLc = tile_l
    while TLc > 128 and _step_bytes(TLc) > budget:
        TLc -= 128

    if L_out <= TLc:
        TL, nLT = L_out, 1                # single full-extent block (any width allowed)
    else:
        TL, nLT = TLc, pl.cdiv(L_out, TLc)  # lane-dense, 128-aligned blocks
    L_out_pad = nLT * TL

    # ---- regroup input (bf16): xg[n, r*C_in + c, l] = x_pad[n, c, 4l + r] ----
    xc = x.astype(compute_dtype)
    l_raw = stride * (L_out_pad + 1)
    x_p = jnp.pad(xc, ((0, 0), (0, 0), (pad, l_raw - L - pad)))
    xg = x_p.reshape(N, C_in, L_out_pad + 1, stride).transpose(0, 3, 1, 2)
    xg = xg.reshape(N, K4, L_out_pad + 1)
    xg = jnp.pad(xg, ((0, 0), (0, K4p - K4), (0, 0)))

    xa = xg[:, :, :L_out_pad]                                   # (N, K4p, L_out_pad)
    halo = xg[:, :, TL::TL]                                     # (N, K4p, nLT): column l0+TL per tile
    halo = halo.transpose(0, 2, 1).reshape(N * nLT, 1, K4p)     # (N*nLT, 1, K4p)

    # ---- weights: taps 0..3 act on group l (WA), taps 4..6 on group l+1 (WB); stacked ----
    def _pack(wk):                        # (C_out, C_in, 4) -> (C_out_p, K4p), j = r*C_in + c
        m = wk.transpose(0, 2, 1).reshape(C_out, K4)
        return jnp.pad(m, ((0, C_out_p - C_out), (0, K4p - K4)))

    wa = _pack(w[:, :, 0:4])
    wb = _pack(jnp.pad(w[:, :, 4:7], ((0, 0), (0, 0), (0, 1))))      # zero 4th tap
    wab = jnp.concatenate([wa, wb], axis=0).astype(compute_dtype)    # (2*C_out_p, K4p)
    b_p = jnp.pad(b, (0, C_out_p - C_out)).reshape(C_out_p, 1).astype(jnp.float32)

    # ---- shared in-kernel conv + bias + LeakyReLU on one (C_out_p, TL) tile ----
    def _conv_leaky(xa_ref, halo_ref, wab_ref, b_ref):
        xa_blk = xa_ref[0]                                           # (K4p, TL)
        wab_m = wab_ref[...]                                         # (2*C_out_p, K4p)
        z = jnp.dot(wab_m, xa_blk, preferred_element_type=jnp.float32)   # one MXU push
        za = z[:C_out_p]                                             # WA @ xg[:, l]
        zb = z[C_out_p:]                                             # WB @ xg[:, l]
        # Halo term (tile's last column uses group l0+TL): VPU mul + lane reduce in f32.
        wb_f = wab_m[C_out_p:].astype(jnp.float32)
        halo_f = halo_ref[0].astype(jnp.float32)                     # (1, K4p)
        zh = jnp.sum(wb_f * halo_f, axis=1, keepdims=True)           # (C_out_p, 1)
        if TL > 1:
            zb = jnp.concatenate([zb[:, 1:], zh], axis=1)            # WB @ xg[:, l+1]
        else:
            zb = zh
        y = za + zb + b_ref[...]
        return jnp.maximum(y, 0.2 * y)                               # LeakyReLU(0.2)

    grid = (N, nLT)
    xa_spec = pl.BlockSpec((1, K4p, TL), lambda n, t: (n, 0, t))
    halo_spec = pl.BlockSpec((1, 1, K4p), lambda n, t: (n * nLT + t, 0, 0))
    wab_spec = pl.BlockSpec((2 * C_out_p, K4p), lambda n, t: (0, 0))     # resident
    vec_spec = pl.BlockSpec((C_out_p, 1), lambda n, t: (0, 0))           # resident
    cparams = pltpu.CompilerParams(
        dimension_semantics=("parallel", "parallel"),
        vmem_limit_bytes=vmem_limit,
    )

    # ---- pass 1: per-tile per-channel sum / sumsq only (tiny output, no y round trip) ----
    def stats_kernel(xa_ref, halo_ref, wab_ref, b_ref, st_ref):
        y = _conv_leaky(xa_ref, halo_ref, wab_ref, b_ref)
        if L_out_pad != L_out:                                       # mask padded L columns
            lane = jax.lax.broadcasted_iota(jnp.int32, y.shape, 1)
            y = jnp.where(pl.program_id(1) * TL + lane < L_out, y, 0.0)
        st_ref[0, 0, :, 0:1] = jnp.sum(y, axis=1, keepdims=True)
        st_ref[0, 0, :, 1:2] = jnp.sum(y * y, axis=1, keepdims=True)

    stats = pl.pallas_call(
        stats_kernel,
        grid=grid,
        in_specs=[xa_spec, halo_spec, wab_spec, vec_spec],
        out_specs=pl.BlockSpec((1, 1, C_out_p, 2), lambda n, t: (n, t, 0, 0)),
        out_shape=jax.ShapeDtypeStruct((N, nLT, C_out_p, 2), jnp.float32),
        compiler_params=cparams,
    )(xa, halo, wab, b_p)

    # ---- fold BN stats (biased var, eps=1e-5) into per-channel scale/shift (tiny JAX) ----
    cnt = jnp.float32(N * L_out)
    mean = jnp.sum(stats[..., 0], axis=(0, 1)) / cnt
    var = jnp.maximum(jnp.sum(stats[..., 1], axis=(0, 1)) / cnt - mean * mean, 0.0)
    inv_std = jax.lax.rsqrt(var + 1e-5)
    gamma_p = jnp.pad(gamma, (0, C_out_p - C_out))
    beta_p = jnp.pad(beta, (0, C_out_p - C_out))
    scale = (gamma_p * inv_std).reshape(C_out_p, 1).astype(jnp.float32)
    shift = (beta_p - mean * gamma_p * inv_std).reshape(C_out_p, 1).astype(jnp.float32)

    # ---- pass 2: recompute conv + LeakyReLU, normalize, write unpadded output directly ----
    def norm_kernel(xa_ref, halo_ref, wab_ref, b_ref, sc_ref, sh_ref, o_ref):
        y = _conv_leaky(xa_ref, halo_ref, wab_ref, b_ref)
        o_ref[0] = (y * sc_ref[...] + sh_ref[...])[:C_out]

    out = pl.pallas_call(
        norm_kernel,
        grid=grid,
        in_specs=[xa_spec, halo_spec, wab_spec, vec_spec, vec_spec, vec_spec],
        out_specs=pl.BlockSpec((1, C_out, TL), lambda n, t: (n, 0, t)),
        out_shape=jax.ShapeDtypeStruct((N, C_out, L_out), jnp.float32),
        compiler_params=cparams,
    )(xa, halo, wab, b_p, scale, shift)

    return out


def _reference(x, w, b, gamma, beta):
    """Pure-JAX reference (Conv1d -> LeakyReLU(0.2) -> train-mode BatchNorm1d)."""
    y = jax.lax.conv_general_dilated(
        x, w, window_strides=(4,), padding=((3, 3),),
        dimension_numbers=("NCH", "OIH", "NCH"),
    ) + b[None, :, None]
    y = jnp.where(y >= 0, y, 0.2 * y)
    mean = jnp.mean(y, axis=(0, 2), keepdims=True)
    var = jnp.mean((y - mean) ** 2, axis=(0, 2), keepdims=True)
    y = (y - mean) * jax.lax.rsqrt(var + 1e-5)
    return y * gamma[None, :, None] + beta[None, :, None]


if __name__ == "__main__":
    key = jax.random.PRNGKey(0)
    k_x, k_w, k_b, k_g, k_be = jax.random.split(key, 5)

    N, C_in, C_out, L = 2, 4, 8, 16
    x = jax.random.normal(k_x, (N, C_in, L), dtype=jnp.float32)
    w = jax.random.normal(k_w, (C_out, C_in, 7), dtype=jnp.float32) * 0.1
    b = jax.random.normal(k_b, (C_out,), dtype=jnp.float32) * 0.1
    gamma = 1.0 + 0.1 * jax.random.normal(k_g, (C_out,), dtype=jnp.float32)
    beta = 0.1 * jax.random.normal(k_be, (C_out,), dtype=jnp.float32)

    L_out = (L + 2 * 3 - 7) // 4 + 1
    ref = _reference(x, w, b, gamma, beta)

    # f32 compute path. Tolerance is loose enough to cover TPU default f32 matmul/conv
    # precision (bf16-pass based) on both the MXU path and the XLA reference.
    fwd_f32 = jax.jit(lambda *a: downsampling_block(*a, compute_dtype=jnp.float32))
    out_f32 = jax.block_until_ready(fwd_f32(x, w, b, gamma, beta))
    assert out_f32.shape == (N, C_out, L_out)
    assert jnp.allclose(out_f32, ref, atol=2e-2, rtol=2e-2), "f32 path mismatch vs reference"

    # Default bf16 MXU path vs a reference whose conv operands were rounded to bf16
    # (same information the MXU sees; both accumulate in f32) — this is the tight check.
    fwd_bf16 = jax.jit(lambda *a: downsampling_block(*a))
    out_bf16 = jax.block_until_ready(fwd_bf16(x, w, b, gamma, beta))
    ref_bf16 = _reference(x.astype(jnp.bfloat16).astype(jnp.float32),
                          w.astype(jnp.bfloat16).astype(jnp.float32), b, gamma, beta)
    assert out_bf16.shape == (N, C_out, L_out)
    assert jnp.allclose(out_bf16, ref_bf16, atol=2e-3, rtol=2e-3), "bf16 path mismatch vs reference"

    print("KERNEL_OK")
</pallas_src>

<mosaic_0001>
module attributes {stable_mosaic.version = 11 : i64} {
  func.func @stats_kernel(%arg0: i32, %arg1: i32, %arg2: memref<1x16x4xf32, #tpu.memory_space<vmem>>, %arg3: memref<1x1x16xf32, #tpu.memory_space<vmem>>, %arg4: memref<16x16xf32, #tpu.memory_space<vmem>>, %arg5: memref<8x1xf32, #tpu.memory_space<vmem>>, %arg6: memref<1x1x8x2xf32, #tpu.memory_space<vmem>>) attributes {dimension_semantics = [#tpu.dimension_semantics<parallel>, #tpu.dimension_semantics<parallel>], iteration_bounds = array<i64: 2, 1>, scalar_prefetch = 0 : i64, scratch_operands = 0 : i64, tpu.core_type = #tpu.core_type<tc>, window_params = [{transform_indices = @transform_0, window_bounds = array<i64: 1, 16, 4>}, {transform_indices = @transform_1, window_bounds = array<i64: 1, 1, 16>}, {pipeline_mode = #tpu.pipeline_mode<synchronous>, transform_indices = @transform_2, window_bounds = array<i64: 16, 16>}, {pipeline_mode = #tpu.pipeline_mode<synchronous>, transform_indices = @transform_3, window_bounds = array<i64: 8, 1>}, {transform_indices = @transform_4, window_bounds = array<i64: 1, 1, 8, 2>}]} {
    %c0 = arith.constant 0 : index
    %c0_0 = arith.constant 0 : index
    %c0_1 = arith.constant 0 : index
    %0 = vector.load %arg2[%c0, %c0_0, %c0_1] : memref<1x16x4xf32, #tpu.memory_space<vmem>>, vector<1x16x4xf32>
    %1 = vector.shape_cast %0 : vector<1x16x4xf32> to vector<16x4xf32>
    %c0_2 = arith.constant 0 : index
    %c0_3 = arith.constant 0 : index
    %2 = vector.load %arg4[%c0_2, %c0_3] : memref<16x16xf32, #tpu.memory_space<vmem>>, vector<16x16xf32>
    %cst = arith.constant dense<0.000000e+00> : vector<16x4xf32>
    %3 = tpu.matmul %2, %1, %cst {dimension_numbers = #tpu.dot_dimension_numbers<[1], [0], [0], [1], [0, 0, 1, 1], [], []>} : vector<16x16xf32>, vector<16x4xf32>, vector<16x4xf32> -> vector<16x4xf32>
    %4 = vector.extract_strided_slice %3 {offsets = [0, 0], sizes = [8, 4], strides = [1, 1]} : vector<16x4xf32> to vector<8x4xf32>
    %5 = vector.extract_strided_slice %3 {offsets = [8, 0], sizes = [8, 4], strides = [1, 1]} : vector<16x4xf32> to vector<8x4xf32>
    %6 = vector.extract_strided_slice %2 {offsets = [8, 0], sizes = [8, 16], strides = [1, 1]} : vector<16x16xf32> to vector<8x16xf32>
    %c0_4 = arith.constant 0 : index
    %c0_5 = arith.constant 0 : index
    %c0_6 = arith.constant 0 : index
    %7 = vector.load %arg3[%c0_4, %c0_5, %c0_6] : memref<1x1x16xf32, #tpu.memory_space<vmem>>, vector<1x1x16xf32>
    %8 = vector.shape_cast %7 : vector<1x1x16xf32> to vector<1x16xf32>
    %9 = vector.broadcast %8 : vector<1x16xf32> to vector<8x16xf32>
    %10 = arith.mulf %6, %9 : vector<8x16xf32>
    %cst_7 = arith.constant dense<0.000000e+00> : vector<8xf32>
    %11 = vector.multi_reduction <add>, %10, %cst_7 [1] : vector<8x16xf32> to vector<8xf32>
    %12 = vector.shape_cast %11 : vector<8xf32> to vector<8x1xf32>
    %13 = vector.extract_strided_slice %5 {offsets = [0, 1], sizes = [8, 3], strides = [1, 1]} : vector<8x4xf32> to vector<8x3xf32>
    %14 = tpu.concatenate %13, %12 in 1 : vector<8x3xf32>, vector<8x1xf32> -> vector<8x4xf32>
    %15 = arith.addf %4, %14 : vector<8x4xf32>
    %c0_8 = arith.constant 0 : index
    %c0_9 = arith.constant 0 : index
    %16 = vector.load %arg5[%c0_8, %c0_9] : memref<8x1xf32, #tpu.memory_space<vmem>>, vector<8x1xf32>
    %17 = vector.broadcast %16 : vector<8x1xf32> to vector<8x4xf32>
    %18 = arith.addf %15, %17 : vector<8x4xf32>
    %cst_10 = arith.constant 2.000000e-01 : f32
    %19 = vector.broadcast %cst_10 : f32 to vector<8x4xf32>
    %20 = arith.mulf %19, %18 : vector<8x4xf32>
    %21 = arith.maximumf %18, %20 : vector<8x4xf32>
    %cst_11 = arith.constant dense<0.000000e+00> : vector<8xf32>
    %22 = vector.multi_reduction <add>, %21, %cst_11 [1] : vector<8x4xf32> to vector<8xf32>
    %23 = vector.shape_cast %22 : vector<8xf32> to vector<8x1xf32>
    %c0_12 = arith.constant 0 : index
    %c0_13 = arith.constant 0 : index
    %c0_14 = arith.constant 0 : index
    %c0_15 = arith.constant 0 : index
    %24 = vector.load %arg6[%c0_12, %c0_13, %c0_14, %c0_15] : memref<1x1x8x2xf32, #tpu.memory_space<vmem>>, vector<1x1x8x1xf32>
    %25 = vector.shape_cast %24 : vector<1x1x8x1xf32> to vector<8x1xf32>
    %26 = vector.shape_cast %23 : vector<8x1xf32> to vector<1x1x8x1xf32>
    tpu.vector_store %arg6[%c0_12, %c0_13, %c0_14, %c0_15], %26 {strides = array<i32>} : memref<1x1x8x2xf32, #tpu.memory_space<vmem>>, vector<1x1x8x1xf32>,
    %27 = arith.mulf %21, %21 : vector<8x4xf32>
    %cst_16 = arith.constant dense<0.000000e+00> : vector<8xf32>
    %28 = vector.multi_reduction <add>, %27, %cst_16 [1] : vector<8x4xf32> to vector<8xf32>
    %29 = vector.shape_cast %28 : vector<8xf32> to vector<8x1xf32>
    %c0_17 = arith.constant 0 : index
    %c0_18 = arith.constant 0 : index
    %c0_19 = arith.constant 0 : index
    %c1 = arith.constant 1 : index
    %30 = vector.load %arg6[%c0_17, %c0_18, %c0_19, %c1] : memref<1x1x8x2xf32, #tpu.memory_space<vmem>>, vector<1x1x8x1xf32>
    %31 = vector.shape_cast %30 : vector<1x1x8x1xf32> to vector<8x1xf32>
    %32 = vector.shape_cast %29 : vector<8x1xf32> to vector<1x1x8x1xf32>
    tpu.vector_store %arg6[%c0_17, %c0_18, %c0_19, %c1], %32 {strides = array<i32>} : memref<1x1x8x2xf32, #tpu.memory_space<vmem>>, vector<1x1x8x1xf32>,
    return
  }
  func.func @transform_0(%arg0: i32, %arg1: i32) -> (i32, i32, i32) {
    %c0_i32 = arith.constant 0 : i32
    %c0_i32_0 = arith.constant 0 : i32
    return %arg0, %c0_i32, %arg1 : i32, i32, i32
  }
  func.func @transform_1(%arg0: i32, %arg1: i32) -> (i32, i32, i32) {
    %c1_i32 = arith.constant 1 : i32
    %0 = arith.muli %arg0, %c1_i32 : i32
    %1 = arith.addi %0, %arg1 : i32
    %c0_i32 = arith.constant 0 : i32
    %c0_i32_0 = arith.constant 0 : i32
    %c0_i32_1 = arith.constant 0 : i32
    return %1, %c0_i32, %c0_i32_0 : i32, i32, i32
  }
  func.func @transform_2(%arg0: i32, %arg1: i32) -> (i32, i32) {
    %c0_i32 = arith.constant 0 : i32
    %c0_i32_0 = arith.constant 0 : i32
    %c0_i32_1 = arith.constant 0 : i32
    return %c0_i32, %c0_i32_0 : i32, i32
  }
  func.func @transform_3(%arg0: i32, %arg1: i32) -> (i32, i32) {
    %c0_i32 = arith.constant 0 : i32
    %c0_i32_0 = arith.constant 0 : i32
    %c0_i32_1 = arith.constant 0 : i32
    return %c0_i32, %c0_i32_0 : i32, i32
  }
  func.func @transform_4(%arg0: i32, %arg1: i32) -> (i32, i32, i32, i32) {
    %c0_i32 = arith.constant 0 : i32
    %c0_i32_0 = arith.constant 0 : i32
    %c0_i32_1 = arith.constant 0 : i32
    return %arg0, %arg1, %c0_i32, %c0_i32_0 : i32, i32, i32, i32
  }
}

module attributes {stable_mosaic.version = 11 : i64} {
  func.func @norm_kernel(%arg0: i32, %arg1: i32, %arg2: memref<1x16x4xf32, #tpu.memory_space<vmem>>, %arg3: memref<1x1x16xf32, #tpu.memory_space<vmem>>, %arg4: memref<16x16xf32, #tpu.memory_space<vmem>>, %arg5: memref<8x1xf32, #tpu.memory_space<vmem>>, %arg6: memref<8x1xf32, #tpu.memory_space<vmem>>, %arg7: memref<8x1xf32, #tpu.memory_space<vmem>>, %arg8: memref<1x8x4xf32, #tpu.memory_space<vmem>>) attributes {dimension_semantics = [#tpu.dimension_semantics<parallel>, #tpu.dimension_semantics<parallel>], iteration_bounds = array<i64: 2, 1>, scalar_prefetch = 0 : i64, scratch_operands = 0 : i64, tpu.core_type = #tpu.core_type<tc>, window_params = [{transform_indices = @transform_0, window_bounds = array<i64: 1, 16, 4>}, {transform_indices = @transform_1, window_bounds = array<i64: 1, 1, 16>}, {pipeline_mode = #tpu.pipeline_mode<synchronous>, transform_indices = @transform_2, window_bounds = array<i64: 16, 16>}, {pipeline_mode = #tpu.pipeline_mode<synchronous>, transform_indices = @transform_3, window_bounds = array<i64: 8, 1>}, {pipeline_mode = #tpu.pipeline_mode<synchronous>, transform_indices = @transform_4, window_bounds = array<i64: 8, 1>}, {pipeline_mode = #tpu.pipeline_mode<synchronous>, transform_indices = @transform_5, window_bounds = array<i64: 8, 1>}, {transform_indices = @transform_6, window_bounds = array<i64: 1, 8, 4>}]} {
    %c0 = arith.constant 0 : index
    %c0_0 = arith.constant 0 : index
    %c0_1 = arith.constant 0 : index
    %0 = vector.load %arg2[%c0, %c0_0, %c0_1] : memref<1x16x4xf32, #tpu.memory_space<vmem>>, vector<1x16x4xf32>
    %1 = vector.shape_cast %0 : vector<1x16x4xf32> to vector<16x4xf32>
    %c0_2 = arith.constant 0 : index
    %c0_3 = arith.constant 0 : index
    %2 = vector.load %arg4[%c0_2, %c0_3] : memref<16x16xf32, #tpu.memory_space<vmem>>, vector<16x16xf32>
    %cst = arith.constant dense<0.000000e+00> : vector<16x4xf32>
    %3 = tpu.matmul %2, %1, %cst {dimension_numbers = #tpu.dot_dimension_numbers<[1], [0], [0], [1], [0, 0, 1, 1], [], []>} : vector<16x16xf32>, vector<16x4xf32>, vector<16x4xf32> -> vector<16x4xf32>
    %4 = vector.extract_strided_slice %3 {offsets = [0, 0], sizes = [8, 4], strides = [1, 1]} : vector<16x4xf32> to vector<8x4xf32>
    %5 = vector.extract_strided_slice %3 {offsets = [8, 0], sizes = [8, 4], strides = [1, 1]} : vector<16x4xf32> to vector<8x4xf32>
    %6 = vector.extract_strided_slice %2 {offsets = [8, 0], sizes = [8, 16], strides = [1, 1]} : vector<16x16xf32> to vector<8x16xf32>
    %c0_4 = arith.constant 0 : index
    %c0_5 = arith.constant 0 : index
    %c0_6 = arith.constant 0 : index
    %7 = vector.load %arg3[%c0_4, %c0_5, %c0_6] : memref<1x1x16xf32, #tpu.memory_space<vmem>>, vector<1x1x16xf32>
    %8 = vector.shape_cast %7 : vector<1x1x16xf32> to vector<1x16xf32>
    %9 = vector.broadcast %8 : vector<1x16xf32> to vector<8x16xf32>
    %10 = arith.mulf %6, %9 : vector<8x16xf32>
    %cst_7 = arith.constant dense<0.000000e+00> : vector<8xf32>
    %11 = vector.multi_reduction <add>, %10, %cst_7 [1] : vector<8x16xf32> to vector<8xf32>
    %12 = vector.shape_cast %11 : vector<8xf32> to vector<8x1xf32>
    %13 = vector.extract_strided_slice %5 {offsets = [0, 1], sizes = [8, 3], strides = [1, 1]} : vector<8x4xf32> to vector<8x3xf32>
    %14 = tpu.concatenate %13, %12 in 1 : vector<8x3xf32>, vector<8x1xf32> -> vector<8x4xf32>
    %15 = arith.addf %4, %14 : vector<8x4xf32>
    %c0_8 = arith.constant 0 : index
    %c0_9 = arith.constant 0 : index
    %16 = vector.load %arg5[%c0_8, %c0_9] : memref<8x1xf32, #tpu.memory_space<vmem>>, vector<8x1xf32>
    %17 = vector.broadcast %16 : vector<8x1xf32> to vector<8x4xf32>
    %18 = arith.addf %15, %17 : vector<8x4xf32>
    %cst_10 = arith.constant 2.000000e-01 : f32
    %19 = vector.broadcast %cst_10 : f32 to vector<8x4xf32>
    %20 = arith.mulf %19, %18 : vector<8x4xf32>
    %21 = arith.maximumf %18, %20 : vector<8x4xf32>
    %c0_11 = arith.constant 0 : index
    %c0_12 = arith.constant 0 : index
    %22 = vector.load %arg6[%c0_11, %c0_12] : memref<8x1xf32, #tpu.memory_space<vmem>>, vector<8x1xf32>
    %23 = vector.broadcast %22 : vector<8x1xf32> to vector<8x4xf32>
    %24 = arith.mulf %21, %23 : vector<8x4xf32>
    %c0_13 = arith.constant 0 : index
    %c0_14 = arith.constant 0 : index
    %25 = vector.load %arg7[%c0_13, %c0_14] : memref<8x1xf32, #tpu.memory_space<vmem>>, vector<8x1xf32>
    %26 = vector.broadcast %25 : vector<8x1xf32> to vector<8x4xf32>
    %27 = arith.addf %24, %26 : vector<8x4xf32>
    %c0_15 = arith.constant 0 : index
    %c0_16 = arith.constant 0 : index
    %c0_17 = arith.constant 0 : index
    %28 = vector.load %arg8[%c0_15, %c0_16, %c0_17] : memref<1x8x4xf32, #tpu.memory_space<vmem>>, vector<1x8x4xf32>
    %29 = vector.shape_cast %28 : vector<1x8x4xf32> to vector<8x4xf32>
    %30 = vector.shape_cast %27 : vector<8x4xf32> to vector<1x8x4xf32>
    tpu.vector_store %arg8[%c0_15, %c0_16, %c0_17], %30 {strides = array<i32>} : memref<1x8x4xf32, #tpu.memory_space<vmem>>, vector<1x8x4xf32>,
    return
  }
  func.func @transform_0(%arg0: i32, %arg1: i32) -> (i32, i32, i32) {
    %c0_i32 = arith.constant 0 : i32
    %c0_i32_0 = arith.constant 0 : i32
    return %arg0, %c0_i32, %arg1 : i32, i32, i32
  }
  func.func @transform_1(%arg0: i32, %arg1: i32) -> (i32, i32, i32) {
    %c1_i32 = arith.constant 1 : i32
    %0 = arith.muli %arg0, %c1_i32 : i32
    %1 = arith.addi %0, %arg1 : i32
    %c0_i32 = arith.constant 0 : i32
    %c0_i32_0 = arith.constant 0 : i32
    %c0_i32_1 = arith.constant 0 : i32
    return %1, %c0_i32, %c0_i32_0 : i32, i32, i32
  }
  func.func @transform_2(%arg0: i32, %arg1: i32) -> (i32, i32) {
    %c0_i32 = arith.constant 0 : i32
    %c0_i32_0 = arith.constant 0 : i32
    %c0_i32_1 = arith.constant 0 : i32
    return %c0_i32, %c0_i32_0 : i32, i32
  }
  func.func @transform_3(%arg0: i32, %arg1: i32) -> (i32, i32) {
    %c0_i32 = arith.constant 0 : i32
    %c0_i32_0 = arith.constant 0 : i32
    %c0_i32_1 = arith.constant 0 : i32
    return %c0_i32, %c0_i32_0 : i32, i32
  }
  func.func @transform_4(%arg0: i32, %arg1: i32) -> (i32, i32) {
    %c0_i32 = arith.constant 0 : i32
    %c0_i32_0 = arith.constant 0 : i32
    %c0_i32_1 = arith.constant 0 : i32
    return %c0_i32, %c0_i32_0 : i32, i32
  }
  func.func @transform_5(%arg0: i32, %arg1: i32) -> (i32, i32) {
    %c0_i32 = arith.constant 0 : i32
    %c0_i32_0 = arith.constant 0 : i32
    %c0_i32_1 = arith.constant 0 : i32
    return %c0_i32, %c0_i32_0 : i32, i32
  }
  func.func @transform_6(%arg0: i32, %arg1: i32) -> (i32, i32, i32) {
    %c0_i32 = arith.constant 0 : i32
    %c0_i32_0 = arith.constant 0 : i32
    return %arg0, %c0_i32, %arg1 : i32, i32, i32
  }
}

</mosaic_0001>

<llo_original>
// kernel: _lambda_.3
$region0: #{_lambda_.3}
  #allocation0 [shape = 'u32[]', space=smem, size = 0x4, offset = 0x4, fixed_abs, tag = 'smem constant byte address 0x4 - core index']
  #allocation1 [shape = 'u32[144,128]{1,0:T(1,128)}', space=vmem, size = 0x12000, scoped, tag = 'internal scratch']
  %s0 = inlined_call_operand.vmem [shape: f32[2,16,4], index: 0, kind: input, shape index: {}]
  %s1 = inlined_call_operand.vmem [shape: f32[2,1,16], index: 1, kind: input, shape index: {}]
  %s2 = inlined_call_operand.vmem [shape: f32[16,16], index: 2, kind: input, shape index: {}]
  %s3 = inlined_call_operand.vmem [shape: f32[8,1], index: 3, kind: input, shape index: {}]
  %s4 = inlined_call_operand.vmem [shape: f32[8,1], index: 4, kind: input, shape index: {}]
  %s5 = inlined_call_operand.vmem [shape: f32[8,1], index: 5, kind: input, shape index: {}]
  %s6 = inlined_call_operand.vmem [shape: f32[2,8,4], index: 6, kind: output, shape index: {}]
  %s7 = sld [smem:[#allocation0]]
  $region57: #{_lambda_.3} parent=0
    _
  %s9 = ssub.s32 1, %s7
  %s10 = scalar_select 0, %s9, %s7
  loop: start=0, step=1, limit=4
  $region2: #{_lambda_.3} parent=0 // loop_pre_header
    _
  $region3: #{_lambda_.3} parent=0 // loop_header
    %s12 = sphi 0, %s16
    %p13 = scmp.ge.s32.totalorder %s12, 4
    %s19 = sphi 0, %s31
    %s20 = sphi 0, %s27
    %s21 = sphi 0, %s19
    %s22 = sphi 0, %s20
    %s23 = sphi 0, %s21
    %s24 = sphi 0, %s22
    %s36 = sphi 0, %s38
    %s39 = sphi 0, %s36
    %s40 = sphi 0, %s39
    %s56 = sphi 0, %s40
    %s64 = sphi 0, %s66
    %s67 = sphi 0, %s64
    %s68 = sphi 0, %s67
    %s84 = sphi 0, %s68
    %s88 = sphi 0, %s88
    %s90 = sphi 0, %s88
    %s91 = sphi 0, %s90
    %s105 = sphi 0, %s91
    %s109 = sphi 0, %s109
    %s111 = sphi 0, %s109
    %s112 = sphi 0, %s111
    %s126 = sphi 0, %s112
    %s130 = sphi 0, %s130
    %s132 = sphi 0, %s130
    %s133 = sphi 0, %s132
    %s147 = sphi 0, %s133
    %s151 = sphi 0, %s151
    %s153 = sphi 0, %s151
    %s154 = sphi 0, %s153
    %s168 = sphi 0, %s154
    %s176 = sphi 0, %s178
    %s179 = sphi 0, %s176
    %s180 = sphi 0, %s179
    %s196 = sphi 0, %s180
  $region4: #{_lambda_.3} parent=0 // loop_header_branch
    %15 = sbr.rel (%p13) target = $region8
  $region5: #{_lambda_.3} parent=0 // loop_body
    %s17 = ssub.s32 %s12, 1
    %s18 = ssub.s32 %s12, 2
    %s25 = sadd.s32 1, %s20
    %p26 = scmp.ge.s32.totalorder %s25, 1
    %s27 = scalar_select %p26, 0, %s25
    %s28 = sadd.s32 1, %s19
    %s29 = scalar_select %p26, %s28, %s19
    %p30 = scmp.ge.s32.totalorder %s29, 2
    %s31 = scalar_select %p30, 0, %s29
    %s32 = ssub.s32 %s19, %s31
    %s33 = ssub.s32 %s20, %s27
    %s34 = sor.u32 %s32, %s33
    %p35 = scmp.eq.s32.totalorder %s34, 0
    %s37 = sadd.s32 %s36, 1
    %s38 = scalar_select %p35, %s36, %s37
    %p41 = pneg %p35
    %p42 = scmp.eq.s32.totalorder %s12, 1
    %p43 = por %p41, %p42
    %p44 = scmp.ne.s32.totalorder %s36, %s39
    %p45 = scmp.eq.s32.totalorder %s12, 0
    %p46 = por %p44, %p45
    %p47 = scmp.ne.s32.totalorder %s36, %s39
    %p48 = scmp.eq.s32.totalorder %s17, 1
    %p49 = por %p47, %p48
    %p50 = scmp.ne.s32.totalorder %s39, %s40
    %p51 = scmp.eq.s32.totalorder %s17, 0
    %p52 = por %p50, %p51
    %p53 = scmp.ne.s32.totalorder %s39, %s40
    %p54 = scmp.eq.s32.totalorder %s18, 1
    %p55 = por %p53, %p54
    %p57 = scmp.ne.s32.totalorder %s40, %s56
    %p58 = scmp.eq.s32.totalorder %s18, 0
    %p59 = por %p57, %p58
    %s60 = sadd.s32 %s19, %s20
    %s61 = sadd.s32 %s31, %s27
    %s62 = ssub.s32 %s60, %s61
    %p63 = scmp.eq.s32.totalorder %s62, 0
    %s65 = sadd.s32 %s64, 1
    %s66 = scalar_select %p63, %s64, %s65
    %p69 = pneg %p63
    %p70 = scmp.eq.s32.totalorder %s12, 1
    %p71 = por %p69, %p70
    %p72 = scmp.ne.s32.totalorder %s64, %s67
    %p73 = scmp.eq.s32.totalorder %s12, 0
    %p74 = por %p72, %p73
    %p75 = scmp.ne.s32.totalorder %s64, %s67
    %p76 = scmp.eq.s32.totalorder %s17, 1
    %p77 = por %p75, %p76
    %p78 = scmp.ne.s32.totalorder %s67, %s68
    %p79 = scmp.eq.s32.totalorder %s17, 0
    %p80 = por %p78, %p79
    %p81 = scmp.ne.s32.totalorder %s67, %s68
    %p82 = scmp.eq.s32.totalorder %s18, 1
    %p83 = por %p81, %p82
    %p85 = scmp.ne.s32.totalorder %s68, %s84
    %p86 = scmp.eq.s32.totalorder %s18, 0
    %p87 = por %p85, %p86
    %s89 = sadd.s32 %s88, 1
    %p92 = scmp.eq.s32.totalorder %s12, 1
    %p93 = scmp.ne.s32.totalorder %s88, %s90
    %p94 = scmp.eq.s32.totalorder %s12, 0
    %p95 = por %p93, %p94
    %p96 = scmp.ne.s32.totalorder %s88, %s90
    %p97 = scmp.eq.s32.totalorder %s17, 1
    %p98 = por %p96, %p97
    %p99 = scmp.ne.s32.totalorder %s90, %s91
    %p100 = scmp.eq.s32.totalorder %s17, 0
    %p101 = por %p99, %p100
    %p102 = scmp.ne.s32.totalorder %s90, %s91
    %p103 = scmp.eq.s32.totalorder %s18, 1
    %p104 = por %p102, %p103
    %p106 = scmp.ne.s32.totalorder %s91, %s105
    %p107 = scmp.eq.s32.totalorder %s18, 0
    %p108 = por %p106, %p107
    %s110 = sadd.s32 %s109, 1
    %p113 = scmp.eq.s32.totalorder %s12, 1
    %p114 = scmp.ne.s32.totalorder %s109, %s111
    %p115 = scmp.eq.s32.totalorder %s12, 0
    %p116 = por %p114, %p115
    %p117 = scmp.ne.s32.totalorder %s109, %s111
    %p118 = scmp.eq.s32.totalorder %s17, 1
    %p119 = por %p117, %p118
    %p120 = scmp.ne.s32.totalorder %s111, %s112
    %p121 = scmp.eq.s32.totalorder %s17, 0
    %p122 = por %p120, %p121
    %p123 = scmp.ne.s32.totalorder %s111, %s112
    %p124 = scmp.eq.s32.totalorder %s18, 1
    %p125 = por %p123, %p124
    %p127 = scmp.ne.s32.totalorder %s112, %s126
    %p128 = scmp.eq.s32.totalorder %s18, 0
    %p129 = por %p127, %p128
    %s131 = sadd.s32 %s130, 1
    %p134 = scmp.eq.s32.totalorder %s12, 1
    %p135 = scmp.ne.s32.totalorder %s130, %s132
    %p136 = scmp.eq.s32.totalorder %s12, 0
    %p137 = por %p135, %p136
    %p138 = scmp.ne.s32.totalorder %s130, %s132
    %p139 = scmp.eq.s32.totalorder %s17, 1
    %p140 = por %p138, %p139
    %p141 = scmp.ne.s32.totalorder %s132, %s133
    %p142 = scmp.eq.s32.totalorder %s17, 0
    %p143 = por %p141, %p142
    %p144 = scmp.ne.s32.totalorder %s132, %s133
    %p145 = scmp.eq.s32.totalorder %s18, 1
    %p146 = por %p144, %p145
    %p148 = scmp.ne.s32.totalorder %s133, %s147
    %p149 = scmp.eq.s32.totalorder %s18, 0
    %p150 = por %p148, %p149
    %s152 = sadd.s32 %s151, 1
    %p155 = scmp.eq.s32.totalorder %s12, 1
    %p156 = scmp.ne.s32.totalorder %s151, %s153
    %p157 = scmp.eq.s32.totalorder %s12, 0
    %p158 = por %p156, %p157
    %p159 = scmp.ne.s32.totalorder %s151, %s153
    %p160 = scmp.eq.s32.totalorder %s17, 1
    %p161 = por %p159, %p160
    %p162 = scmp.ne.s32.totalorder %s153, %s154
    %p163 = scmp.eq.s32.totalorder %s17, 0
    %p164 = por %p162, %p163
    %p165 = scmp.ne.s32.totalorder %s153, %s154
    %p166 = scmp.eq.s32.totalorder %s18, 1
    %p167 = por %p165, %p166
    %p169 = scmp.ne.s32.totalorder %s154, %s168
    %p170 = scmp.eq.s32.totalorder %s18, 0
    %p171 = por %p169, %p170
    %s172 = ssub.s32 %s19, %s31
    %s173 = ssub.s32 %s20, %s27
    %s174 = sor.u32 %s172, %s173
    %p175 = scmp.eq.s32.totalorder %s174, 0
    %s177 = sadd.s32 %s176, 1
    %s178 = scalar_select %p175, %s176, %s177
    %p181 = pneg %p175
    %p182 = scmp.eq.s32.totalorder %s12, 1
    %p183 = por %p181, %p182
    %p184 = scmp.ne.s32.totalorder %s176, %s179
    %p185 = scmp.eq.s32.totalorder %s12, 0
    %p186 = por %p184, %p185
    %p187 = scmp.ne.s32.totalorder %s176, %s179
    %p188 = scmp.eq.s32.totalorder %s17, 1
    %p189 = por %p187, %p188
    %p190 = scmp.ne.s32.totalorder %s179, %s180
    %p191 = scmp.eq.s32.totalorder %s17, 0
    %p192 = por %p190, %p191
    %p193 = scmp.ne.s32.totalorder %s179, %s180
    %p194 = scmp.eq.s32.totalorder %s18, 1
    %p195 = por %p193, %p194
    %p197 = scmp.ne.s32.totalorder %s180, %s196
    %p198 = scmp.eq.s32.totalorder %s18, 0
    %p199 = por %p197, %p198
    %p200 = scmp.le.s32.totalorder 1, %s12
    %p201 = scmp.lt.s32.totalorder %s12, 3
    %p202 = pnand %p200, %p201
    %p203 = pneg %p202
    // Predicated region
    $region9: #{_lambda_.3} parent=5 // pred_check
      _
    $region10: #{_lambda_.3} parent=5 // pred_check_branch
      %205 = sbr.rel (%p202) target = $region12
    $region11: #{_lambda_.3} parent=5 // pred_region
      %s206 = ssub.s32 %s12, 1
      // Predicated region
      $region13: #{_lambda_.3} parent=11 // pred_check
        %p207 = pneg %p101
      $region14: #{_lambda_.3} parent=11 // pred_check_branch
        %209 = sbr.rel (%p207) target = $region16
      $region15: #{_lambda_.3} parent=11 // pred_region
        _
      $region16: #{_lambda_.3} parent=11 // pred_fallthru
        _
      // Predicated region
      $region17: #{_lambda_.3} parent=11 // pred_check
        %p210 = pneg %p122
      $region18: #{_lambda_.3} parent=11 // pred_check_branch
        %212 = sbr.rel (%p210) target = $region20
      $region19: #{_lambda_.3} parent=11 // pred_region
        _
      $region20: #{_lambda_.3} parent=11 // pred_fallthru
        _
      // Predicated region
      $region21: #{_lambda_.3} parent=11 // pred_check
        %p213 = pneg %p143
      $region22: #{_lambda_.3} parent=11 // pred_check_branch
        %215 = sbr.rel (%p213) target = $region24
      $region23: #{_lambda_.3} parent=11 // pred_region
        _
      $region24: #{_lambda_.3} parent=11 // pred_fallthru
        _
      // Predicated region
      $region25: #{_lambda_.3} parent=11 // pred_check
        %p216 = pneg %p164
      $region26: #{_lambda_.3} parent=11 // pred_check_branch
        %218 = sbr.rel (%p216) target = $region28
      $region27: #{_lambda_.3} parent=11 // pred_region
        _
      $region28: #{_lambda_.3} parent=11 // pred_fallthru
        _
    $region12: #{_lambda_.3} parent=5 // pred_fallthru
      _
    %p219 = scmp.lt.s32.totalorder %s12, 2
    // Predicated region
    $region29: #{_lambda_.3} parent=5 // pred_check
      %p220 = pneg %p219
    $region30: #{_lambda_.3} parent=5 // pred_check_branch
      %222 = sbr.rel (%p220) target = $region32
    $region31: #{_lambda_.3} parent=5 // pred_region
      // Predicated region
      $region33: #{_lambda_.3} parent=31 // pred_check
        %p223 = pneg %p46
      $region34: #{_lambda_.3} parent=31 // pred_check_branch
        %225 = sbr.rel (%p223) target = $region36
      $region35: #{_lambda_.3} parent=31 // pred_region
        %p226 = scmp.lt.s32.totalorder %s19, 1
        %s227 = scalar_select %p226, %s19, 1
        %p228 = scmp.lt.s32.totalorder %s20, 0
        %s229 = scalar_select %p228, %s20, 0
        %s230 = smul.addr %s227, 2
        %s231 = sadd.s32 %s229, %s230
        %s232 = smul.addr %s231, 8
        %s233 = scalar_lea.vmem %s0, %s232
      $region36: #{_lambda_.3} parent=31 // pred_fallthru
        _
      // Predicated region
      $region37: #{_lambda_.3} parent=31 // pred_check
        %p234 = pneg %p74
      $region38: #{_lambda_.3} parent=31 // pred_check_branch
        %236 = sbr.rel (%p234) target = $region40
      $region39: #{_lambda_.3} parent=31 // pred_region
        %s237 = sadd.s32 %s19, %s20
        %p238 = scmp.lt.s32.totalorder %s237, 1
        %s239 = scalar_select %p238, %s237, 1
        %s240 = scalar_lea.vmem %s1, %s239
        %s241 = sadd.s32 %s19, %s20
      $region40: #{_lambda_.3} parent=31 // pred_fallthru
        _
    $region32: #{_lambda_.3} parent=5 // pred_fallthru
      _
    %p242 = scmp.le.s32.totalorder 1, %s12
    %p243 = scmp.lt.s32.totalorder %s12, 3
    %p244 = pnand %p242, %p243
    %p245 = pneg %p244
    // Predicated region
    $region41: #{_lambda_.3} parent=5 // pred_check
      _
    $region42: #{_lambda_.3} parent=5 // pred_check_branch
      %247 = sbr.rel (%p244) target = $region44
    $region43: #{_lambda_.3} parent=5 // pred_region
      %s248 = ssub.s32 %s12, 1
      %p249 = scmp.lt.s32.totalorder %s21, 1
      %s250 = scalar_select %p249, %s21, 1
      %p251 = scmp.lt.s32.totalorder %s22, 0
      %s252 = scalar_select %p251, %s22, 0
      %s253 = smul.addr %s250, 2
      %s254 = sadd.s32 %s252, %s253
      %s255 = smul.addr %s254, 8
      %s256 = scalar_lea.vmem %s0, %s255
      %p257 = pneg %p52
      %p258 = pneg %p49
      %s259 = sadd.s32 %s21, %s22
      %p260 = scmp.lt.s32.totalorder %s259, 1
      %s261 = scalar_select %p260, %s259, 1
      %s262 = scalar_lea.vmem %s1, %s261
      %p263 = pneg %p80
      %p264 = pneg %p77
      %p265 = pneg %p101
      %p266 = pneg %p98
      %p267 = pneg %p122
      %p268 = pneg %p119
      %p269 = pneg %p143
      %p270 = pneg %p140
      %p271 = pneg %p164
      %p272 = pneg %p161
      %p273 = pneg %p192
      %p274 = pneg %p189
      %p275 = scmp.lt.s32.totalorder %s21, 1
      %s276 = scalar_select %p275, %s21, 1
      %p277 = scmp.lt.s32.totalorder %s22, 0
      %s278 = scalar_select %p277, %s22, 0
      %s279 = sadd.s32 %s278, %s276
      %s280 = smul.addr %s279, 8
      %s281 = scalar_lea.vmem %s6, %s280
      %p282 = scmp.lt.s32.totalorder %s21, 1
      %s283 = scalar_select %p282, %s21, 1
      %p284 = scmp.lt.s32.totalorder %s22, 0
      %s285 = scalar_select %p284, %s22, 0
      %s286 = smul.addr %s283, 2
      %s287 = sadd.s32 %s285, %s286
      %s288 = smul.addr %s287, 8
      %s289 = scalar_lea.vmem %s0, %s288
      %s290 = sadd.s32 %s21, %s22
      %p291 = scmp.lt.s32.totalorder %s290, 1
      %s292 = scalar_select %p291, %s290, 1
      %s293 = scalar_lea.vmem %s1, %s292
      %s294 = sadd.s32 %s21, %s22
      %p295 = scmp.lt.s32.totalorder %s21, 1
      %s296 = scalar_select %p295, %s21, 1
      %p297 = scmp.lt.s32.totalorder %s22, 0
      %s298 = scalar_select %p297, %s22, 0
      %s299 = sadd.s32 %s298, %s296
      %s300 = smul.addr %s299, 8
      %s301 = scalar_lea.vmem %s6, %s300
      %v302 = vld [vmem:[%s289] sm:$0xff]
      %v303 = vld [vmem:[%s289 + $0x8] sm:$0xff]
      %v304 = vld [vmem:[%s2] sm:$0xff]
      %v305 = vld [vmem:[%s2 + $0x8] sm:$0xff]
      %vm306 = vcmask 130048
      %v308 = vsel %vm306, %v304, 0
      %v311 = vsel %vm306, %v305, 0
      %313 = vmatprep.subr.mxu0 0.0
      %314 = vmatpush1.msra.mxu0 %v302
      %315 = vmatprep.subr.mxu0 0.0
      %316 = vmatpush1.msra.mxu0 %v303
      %317 = vmatprep.subr.mxu0 0.0
      %318 = vmatpush1.msra.mxu0 0.0
      %319 = vmatprep.subr.mxu0 0.0
      %320 = vmatpush1.msra.mxu0 0.0
      %321 = vmatprep.subr.mxu0 0.0
      %322 = vmatpush1.msra.mxu0 0.0
      %323 = vmatprep.subr.mxu0 0.0
      %324 = vmatpush1.msra.mxu0 0.0
      %325 = vmatprep.subr.mxu0 0.0
      %326 = vmatpush1.msra.mxu0 0.0
      %327 = vmatprep.subr.mxu0 0.0
      %328 = vmatpush1.msra.mxu0 0.0
      %329 = vmatprep.subr.mxu0 0.0
      %330 = vmatpush1.msra.mxu0 0.0
      %331 = vmatprep.subr.mxu0 0.0
      %332 = vmatpush1.msra.mxu0 0.0
      %333 = vmatprep.subr.mxu0 0.0
      %334 = vmatpush1.msra.mxu0 0.0
      %335 = vmatprep.subr.mxu0 0.0
      %336 = vmatpush1.msra.mxu0 0.0
      %337 = vmatprep.subr.mxu0 0.0
      %338 = vmatpush1.msra.mxu0 0.0
      %339 = vmatprep.subr.mxu0 0.0
      %340 = vmatpush1.msra.mxu0 0.0
      %341 = vmatprep.subr.mxu0 0.0
      %342 = vmatpush1.msra.mxu0 0.0
      %343 = vmatprep.subr.mxu0 0.0
      %344 = vmatpush1.msra.mxu0 0.0
      %345 = vmatprep.subr.mxu0 0.0
      %346 = vmatpush1.msra.mxu0 0.0
      %347 = vmatprep.subr.mxu0 0.0
      %348 = vmatpush1.msra.mxu0 0.0
      %349 = vmatprep.subr.mxu0 0.0
      %350 = vmatpush1.msra.mxu0 0.0
      %351 = vmatprep.subr.mxu0 0.0
      %352 = vmatpush1.msra.mxu0 0.0
      %353 = vmatprep.subr.mxu0 0.0
      %354 = vmatpush1.msra.mxu0 0.0
      %355 = vmatprep.subr.mxu0 0.0
      %356 = vmatpush1.msra.mxu0 0.0
      %357 = vmatprep.subr.mxu0 0.0
      %358 = vmatpush1.msra.mxu0 0.0
      %359 = vmatprep.subr.mxu0 0.0
      %360 = vmatpush1.msra.mxu0 0.0
      %361 = vmatprep.subr.mxu0 0.0
      %362 = vmatpush1.msra.mxu0 0.0
      %363 = vmatprep.subr.mxu0 0.0
      %364 = vmatpush1.msra.mxu0 0.0
      %365 = vmatprep.subr.mxu0 0.0
      %366 = vmatpush1.msra.mxu0 0.0
      %367 = vmatprep.subr.mxu0 0.0
      %368 = vmatpush1.msra.mxu0 0.0
      %369 = vmatprep.subr.mxu0 0.0
      %370 = vmatpush1.msra.mxu0 0.0
      %371 = vmatprep.subr.mxu0 0.0
      %372 = vmatpush1.msra.mxu0 0.0
      %373 = vmatprep.subr.mxu0 0.0
      %374 = vmatpush1.msra.mxu0 0.0
      %375 = vmatprep.subr.mxu0 0.0
      %376 = vmatpush1.msra.mxu0 0.0
      %377 = vmatprep.mubr.f32.mxu0 0.0
      %378 = vmatmul.mubr.f32.gmra.mrb[0].mxu0 %v308
      %v379 = vpop.f32.mrb[0].mxu0
      %v380 = vadd.f32 0.0, %v379
      %v381 = vpop.f32.mrb[0].mxu0
      %382 = vmatprep.mubr.f32.mxu0 0.0
      %383 = vmatmul.mubr.f32.gmra.mrb[0].mxu0 %v311
      %v384 = vpop.f32.mrb[0].mxu0
      %v385 = vadd.f32 0.0, %v384
      %v386 = vpop.f32.mrb[0].mxu0
      %387 = vdwg.mxu0
      %v388 = vld [vmem:[%s293] sm:$0x1]
      %v390 = vlaneseq
      %v391 = vshrl.u32 %v390, 7
      %v392 = vsub.s32 0, %v391
      %v393 = vrot.slane %v388, %v392
      %v395 = vmul.f32 %v305, %v393
      %v396 = vsel %vm306, %v395, 0.0
      %397 = vadd.xlane.f32.xlu0 %v396
      %v398 = vpop.xlane.xlu0 %397
      %400 = vrot.lane.b32.xlu0 %v385, 127
      %v401 = vpop.permute.xlu0 %400
      %vm403 = vcmask 23552
      %v404 = vsel %vm403, %v401, %v398
      %v405 = vadd.f32 %v380, %v404
      %v406 = vld [vmem:[%s3] sm:$0xff]
      %408 = vset.pattern.permute.xlu0 0
      %409 = vperm.xlu0 %408, %v406
      %v410 = vpop.permute.xlu0 %409
      %v412 = vadd.f32 %v405, %v410
      %v413 = vmul.f32 %v412, 0.2
      %v414 = vmax.f32 %v412, %v413
      %v415 = vld [vmem:[%s4] sm:$0xff]
      %417 = vset.pattern.permute.xlu0 0
      %418 = vperm.xlu0 %417, %v415
      %v419 = vpop.permute.xlu0 %418
      %v421 = vmul.f32 %v414, %v419
      %v422 = vld [vmem:[%s5] sm:$0xff]
      %424 = vset.pattern.permute.xlu0 0
      %425 = vperm.xlu0 %424, %v422
      %v426 = vpop.permute.xlu0 %425
      %v428 = vadd.f32 %v421, %v426
      %vm429 = vcmask 31744
      %430 = vst.msk [vmem:[%s301] sm:$0xff] %vm429, %v428
      %p431 = scmp.lt.s32.totalorder %s21, 1
      %s432 = scalar_select %p431, %s21, 1
      %p433 = scmp.lt.s32.totalorder %s22, 0
      %s434 = scalar_select %p433, %s22, 0
      %s435 = sadd.s32 %s434, %s432
      %s436 = smul.addr %s435, 8
      %s437 = scalar_lea.vmem %s6, %s436
      // Predicated region
      $region45: #{_lambda_.3} parent=43 // pred_check
        %p438 = pneg %p189
      $region46: #{_lambda_.3} parent=43 // pred_check_branch
        %440 = sbr.rel (%p438) target = $region48
      $region47: #{_lambda_.3} parent=43 // pred_region
        _
      $region48: #{_lambda_.3} parent=43 // pred_fallthru
        _
    $region44: #{_lambda_.3} parent=5 // pred_fallthru
      _
    %p441 = scmp.le.s32.totalorder 2, %s12
    // Predicated region
    $region49: #{_lambda_.3} parent=5 // pred_check
      %p442 = pneg %p441
    $region50: #{_lambda_.3} parent=5 // pred_check_branch
      %444 = sbr.rel (%p442) target = $region52
    $region51: #{_lambda_.3} parent=5 // pred_region
      %s445 = ssub.s32 %s12, 2
      // Predicated region
      $region53: #{_lambda_.3} parent=51 // pred_check
        %p446 = pneg %p195
      $region54: #{_lambda_.3} parent=51 // pred_check_branch
        %448 = sbr.rel (%p446) target = $region56
      $region55: #{_lambda_.3} parent=51 // pred_region
        %p449 = scmp.lt.s32.totalorder %s23, 1
        %s450 = scalar_select %p449, %s23, 1
        %p451 = scmp.lt.s32.totalorder %s24, 0
        %s452 = scalar_select %p451, %s24, 0
        %s453 = sadd.s32 %s452, %s450
        %s454 = smul.addr %s453, 8
        %s455 = scalar_lea.vmem %s6, %s454
      $region56: #{_lambda_.3} parent=51 // pred_fallthru
        _
    $region52: #{_lambda_.3} parent=5 // pred_fallthru
      _
  $region6: #{_lambda_.3} parent=0 // loop_footer
    %s16 = sadd.s32 1, %s12
  $region7: #{_lambda_.3} parent=0 // loop_footer_branch
    %11 = sbr.rel target = $region3
  $region8: #{_lambda_.3} parent=0 // loop_exit
    _

// kernel: _lambda_.2
$region0: #{_lambda_.2}
  #allocation0 [shape = 'u32[]', space=smem, size = 0x4, offset = 0x4, fixed_abs, tag = 'smem constant byte address 0x4 - core index']
  #allocation1 [shape = 'u32[144,128]{1,0:T(1,128)}', space=vmem, size = 0x12000, scoped, tag = 'internal scratch']
  %s0 = inlined_call_operand.vmem [shape: f32[2,16,4], index: 0, kind: input, shape index: {}]
  %s1 = inlined_call_operand.vmem [shape: f32[2,1,16], index: 1, kind: input, shape index: {}]
  %s2 = inlined_call_operand.vmem [shape: f32[16,16], index: 2, kind: input, shape index: {}]
  %s3 = inlined_call_operand.vmem [shape: f32[8,1], index: 3, kind: input, shape index: {}]
  %s4 = inlined_call_operand.vmem [shape: f32[2,1,8,2], index: 4, kind: output, shape index: {}]
  %s5 = sld [smem:[#allocation0]]
  $region49: #{_lambda_.2} parent=0
    _
  %s7 = ssub.s32 1, %s5
  %s8 = scalar_select 0, %s7, %s5
  loop: start=0, step=1, limit=4
  $region2: #{_lambda_.2} parent=0 // loop_pre_header
    _
  $region3: #{_lambda_.2} parent=0 // loop_header
    %s10 = sphi 0, %s14
    %p11 = scmp.ge.s32.totalorder %s10, 4
    %s17 = sphi 0, %s29
    %s18 = sphi 0, %s25
    %s19 = sphi 0, %s17
    %s20 = sphi 0, %s18
    %s21 = sphi 0, %s19
    %s22 = sphi 0, %s20
    %s34 = sphi 0, %s36
    %s37 = sphi 0, %s34
    %s38 = sphi 0, %s37
    %s54 = sphi 0, %s38
    %s62 = sphi 0, %s64
    %s65 = sphi 0, %s62
    %s66 = sphi 0, %s65
    %s82 = sphi 0, %s66
    %s86 = sphi 0, %s86
    %s88 = sphi 0, %s86
    %s89 = sphi 0, %s88
    %s103 = sphi 0, %s89
    %s107 = sphi 0, %s107
    %s109 = sphi 0, %s107
    %s110 = sphi 0, %s109
    %s124 = sphi 0, %s110
    %s132 = sphi 0, %s134
    %s135 = sphi 0, %s132
    %s136 = sphi 0, %s135
    %s152 = sphi 0, %s136
  $region4: #{_lambda_.2} parent=0 // loop_header_branch
    %13 = sbr.rel (%p11) target = $region8
  $region5: #{_lambda_.2} parent=0 // loop_body
    %s15 = ssub.s32 %s10, 1
    %s16 = ssub.s32 %s10, 2
    %s23 = sadd.s32 1, %s18
    %p24 = scmp.ge.s32.totalorder %s23, 1
    %s25 = scalar_select %p24, 0, %s23
    %s26 = sadd.s32 1, %s17
    %s27 = scalar_select %p24, %s26, %s17
    %p28 = scmp.ge.s32.totalorder %s27, 2
    %s29 = scalar_select %p28, 0, %s27
    %s30 = ssub.s32 %s17, %s29
    %s31 = ssub.s32 %s18, %s25
    %s32 = sor.u32 %s30, %s31
    %p33 = scmp.eq.s32.totalorder %s32, 0
    %s35 = sadd.s32 %s34, 1
    %s36 = scalar_select %p33, %s34, %s35
    %p39 = pneg %p33
    %p40 = scmp.eq.s32.totalorder %s10, 1
    %p41 = por %p39, %p40
    %p42 = scmp.ne.s32.totalorder %s34, %s37
    %p43 = scmp.eq.s32.totalorder %s10, 0
    %p44 = por %p42, %p43
    %p45 = scmp.ne.s32.totalorder %s34, %s37
    %p46 = scmp.eq.s32.totalorder %s15, 1
    %p47 = por %p45, %p46
    %p48 = scmp.ne.s32.totalorder %s37, %s38
    %p49 = scmp.eq.s32.totalorder %s15, 0
    %p50 = por %p48, %p49
    %p51 = scmp.ne.s32.totalorder %s37, %s38
    %p52 = scmp.eq.s32.totalorder %s16, 1
    %p53 = por %p51, %p52
    %p55 = scmp.ne.s32.totalorder %s38, %s54
    %p56 = scmp.eq.s32.totalorder %s16, 0
    %p57 = por %p55, %p56
    %s58 = sadd.s32 %s17, %s18
    %s59 = sadd.s32 %s29, %s25
    %s60 = ssub.s32 %s58, %s59
    %p61 = scmp.eq.s32.totalorder %s60, 0
    %s63 = sadd.s32 %s62, 1
    %s64 = scalar_select %p61, %s62, %s63
    %p67 = pneg %p61
    %p68 = scmp.eq.s32.totalorder %s10, 1
    %p69 = por %p67, %p68
    %p70 = scmp.ne.s32.totalorder %s62, %s65
    %p71 = scmp.eq.s32.totalorder %s10, 0
    %p72 = por %p70, %p71
    %p73 = scmp.ne.s32.totalorder %s62, %s65
    %p74 = scmp.eq.s32.totalorder %s15, 1
    %p75 = por %p73, %p74
    %p76 = scmp.ne.s32.totalorder %s65, %s66
    %p77 = scmp.eq.s32.totalorder %s15, 0
    %p78 = por %p76, %p77
    %p79 = scmp.ne.s32.totalorder %s65, %s66
    %p80 = scmp.eq.s32.totalorder %s16, 1
    %p81 = por %p79, %p80
    %p83 = scmp.ne.s32.totalorder %s66, %s82
    %p84 = scmp.eq.s32.totalorder %s16, 0
    %p85 = por %p83, %p84
    %s87 = sadd.s32 %s86, 1
    %p90 = scmp.eq.s32.totalorder %s10, 1
    %p91 = scmp.ne.s32.totalorder %s86, %s88
    %p92 = scmp.eq.s32.totalorder %s10, 0
    %p93 = por %p91, %p92
    %p94 = scmp.ne.s32.totalorder %s86, %s88
    %p95 = scmp.eq.s32.totalorder %s15, 1
    %p96 = por %p94, %p95
    %p97 = scmp.ne.s32.totalorder %s88, %s89
    %p98 = scmp.eq.s32.totalorder %s15, 0
    %p99 = por %p97, %p98
    %p100 = scmp.ne.s32.totalorder %s88, %s89
    %p101 = scmp.eq.s32.totalorder %s16, 1
    %p102 = por %p100, %p101
    %p104 = scmp.ne.s32.totalorder %s89, %s103
    %p105 = scmp.eq.s32.totalorder %s16, 0
    %p106 = por %p104, %p105
    %s108 = sadd.s32 %s107, 1
    %p111 = scmp.eq.s32.totalorder %s10, 1
    %p112 = scmp.ne.s32.totalorder %s107, %s109
    %p113 = scmp.eq.s32.totalorder %s10, 0
    %p114 = por %p112, %p113
    %p115 = scmp.ne.s32.totalorder %s107, %s109
    %p116 = scmp.eq.s32.totalorder %s15, 1
    %p117 = por %p115, %p116
    %p118 = scmp.ne.s32.totalorder %s109, %s110
    %p119 = scmp.eq.s32.totalorder %s15, 0
    %p120 = por %p118, %p119
    %p121 = scmp.ne.s32.totalorder %s109, %s110
    %p122 = scmp.eq.s32.totalorder %s16, 1
    %p123 = por %p121, %p122
    %p125 = scmp.ne.s32.totalorder %s110, %s124
    %p126 = scmp.eq.s32.totalorder %s16, 0
    %p127 = por %p125, %p126
    %s128 = ssub.s32 %s17, %s29
    %s129 = ssub.s32 %s18, %s25
    %s130 = sor.u32 %s128, %s129
    %p131 = scmp.eq.s32.totalorder %s130, 0
    %s133 = sadd.s32 %s132, 1
    %s134 = scalar_select %p131, %s132, %s133
    %p137 = pneg %p131
    %p138 = scmp.eq.s32.totalorder %s10, 1
    %p139 = por %p137, %p138
    %p140 = scmp.ne.s32.totalorder %s132, %s135
    %p141 = scmp.eq.s32.totalorder %s10, 0
    %p142 = por %p140, %p141
    %p143 = scmp.ne.s32.totalorder %s132, %s135
    %p144 = scmp.eq.s32.totalorder %s15, 1
    %p145 = por %p143, %p144
    %p146 = scmp.ne.s32.totalorder %s135, %s136
    %p147 = scmp.eq.s32.totalorder %s15, 0
    %p148 = por %p146, %p147
    %p149 = scmp.ne.s32.totalorder %s135, %s136
    %p150 = scmp.eq.s32.totalorder %s16, 1
    %p151 = por %p149, %p150
    %p153 = scmp.ne.s32.totalorder %s136, %s152
    %p154 = scmp.eq.s32.totalorder %s16, 0
    %p155 = por %p153, %p154
    %p156 = scmp.le.s32.totalorder 1, %s10
    %p157 = scmp.lt.s32.totalorder %s10, 3
    %p158 = pnand %p156, %p157
    %p159 = pneg %p158
    // Predicated region
    $region9: #{_lambda_.2} parent=5 // pred_check
      _
    $region10: #{_lambda_.2} parent=5 // pred_check_branch
      %161 = sbr.rel (%p158) target = $region12
    $region11: #{_lambda_.2} parent=5 // pred_region
      %s162 = ssub.s32 %s10, 1
      // Predicated region
      $region13: #{_lambda_.2} parent=11 // pred_check
        %p163 = pneg %p99
      $region14: #{_lambda_.2} parent=11 // pred_check_branch
        %165 = sbr.rel (%p163) target = $region16
      $region15: #{_lambda_.2} parent=11 // pred_region
        _
      $region16: #{_lambda_.2} parent=11 // pred_fallthru
        _
      // Predicated region
      $region17: #{_lambda_.2} parent=11 // pred_check
        %p166 = pneg %p120
      $region18: #{_lambda_.2} parent=11 // pred_check_branch
        %168 = sbr.rel (%p166) target = $region20
      $region19: #{_lambda_.2} parent=11 // pred_region
        _
      $region20: #{_lambda_.2} parent=11 // pred_fallthru
        _
    $region12: #{_lambda_.2} parent=5 // pred_fallthru
      _
    %p169 = scmp.lt.s32.totalorder %s10, 2
    // Predicated region
    $region21: #{_lambda_.2} parent=5 // pred_check
      %p170 = pneg %p169
    $region22: #{_lambda_.2} parent=5 // pred_check_branch
      %172 = sbr.rel (%p170) target = $region24
    $region23: #{_lambda_.2} parent=5 // pred_region
      // Predicated region
      $region25: #{_lambda_.2} parent=23 // pred_check
        %p173 = pneg %p44
      $region26: #{_lambda_.2} parent=23 // pred_check_branch
        %175 = sbr.rel (%p173) target = $region28
      $region27: #{_lambda_.2} parent=23 // pred_region
        %p176 = scmp.lt.s32.totalorder %s17, 1
        %s177 = scalar_select %p176, %s17, 1
        %p178 = scmp.lt.s32.totalorder %s18, 0
        %s179 = scalar_select %p178, %s18, 0
        %s180 = smul.addr %s177, 2
        %s181 = sadd.s32 %s179, %s180
        %s182 = smul.addr %s181, 8
        %s183 = scalar_lea.vmem %s0, %s182
      $region28: #{_lambda_.2} parent=23 // pred_fallthru
        _
      // Predicated region
      $region29: #{_lambda_.2} parent=23 // pred_check
        %p184 = pneg %p72
      $region30: #{_lambda_.2} parent=23 // pred_check_branch
        %186 = sbr.rel (%p184) target = $region32
      $region31: #{_lambda_.2} parent=23 // pred_region
        %s187 = sadd.s32 %s17, %s18
        %p188 = scmp.lt.s32.totalorder %s187, 1
        %s189 = scalar_select %p188, %s187, 1
        %s190 = scalar_lea.vmem %s1, %s189
        %s191 = sadd.s32 %s17, %s18
      $region32: #{_lambda_.2} parent=23 // pred_fallthru
        _
    $region24: #{_lambda_.2} parent=5 // pred_fallthru
      _
    %p192 = scmp.le.s32.totalorder 1, %s10
    %p193 = scmp.lt.s32.totalorder %s10, 3
    %p194 = pnand %p192, %p193
    %p195 = pneg %p194
    // Predicated region
    $region33: #{_lambda_.2} parent=5 // pred_check
      _
    $region34: #{_lambda_.2} parent=5 // pred_check_branch
      %197 = sbr.rel (%p194) target = $region36
    $region35: #{_lambda_.2} parent=5 // pred_region
      %s198 = ssub.s32 %s10, 1
      %p199 = scmp.lt.s32.totalorder %s19, 1
      %s200 = scalar_select %p199, %s19, 1
      %p201 = scmp.lt.s32.totalorder %s20, 0
      %s202 = scalar_select %p201, %s20, 0
      %s203 = smul.addr %s200, 2
      %s204 = sadd.s32 %s202, %s203
      %s205 = smul.addr %s204, 8
      %s206 = scalar_lea.vmem %s0, %s205
      %p207 = pneg %p50
      %p208 = pneg %p47
      %s209 = sadd.s32 %s19, %s20
      %p210 = scmp.lt.s32.totalorder %s209, 1
      %s211 = scalar_select %p210, %s209, 1
      %s212 = scalar_lea.vmem %s1, %s211
      %p213 = pneg %p78
      %p214 = pneg %p75
      %p215 = pneg %p99
      %p216 = pneg %p96
      %p217 = pneg %p120
      %p218 = pneg %p117
      %p219 = pneg %p148
      %p220 = pneg %p145
      %p221 = scmp.lt.s32.totalorder %s19, 1
      %s222 = scalar_select %p221, %s19, 1
      %p223 = scmp.lt.s32.totalorder %s20, 0
      %s224 = scalar_select %p223, %s20, 0
      %s225 = sadd.s32 %s224, %s222
      %s226 = smul.addr %s225, 8
      %s227 = scalar_lea.vmem %s4, %s226
      %p228 = scmp.lt.s32.totalorder %s19, 1
      %s229 = scalar_select %p228, %s19, 1
      %p230 = scmp.lt.s32.totalorder %s20, 0
      %s231 = scalar_select %p230, %s20, 0
      %s232 = smul.addr %s229, 2
      %s233 = sadd.s32 %s231, %s232
      %s234 = smul.addr %s233, 8
      %s235 = scalar_lea.vmem %s0, %s234
      %s236 = sadd.s32 %s19, %s20
      %p237 = scmp.lt.s32.totalorder %s236, 1
      %s238 = scalar_select %p237, %s236, 1
      %s239 = scalar_lea.vmem %s1, %s238
      %s240 = sadd.s32 %s19, %s20
      %p241 = scmp.lt.s32.totalorder %s19, 1
      %s242 = scalar_select %p241, %s19, 1
      %p243 = scmp.lt.s32.totalorder %s20, 0
      %s244 = scalar_select %p243, %s20, 0
      %s245 = sadd.s32 %s244, %s242
      %s246 = smul.addr %s245, 8
      %s247 = scalar_lea.vmem %s4, %s246
      %v248 = vld [vmem:[%s235] sm:$0xff]
      %v249 = vld [vmem:[%s235 + $0x8] sm:$0xff]
      %v250 = vld [vmem:[%s2] sm:$0xff]
      %v251 = vld [vmem:[%s2 + $0x8] sm:$0xff]
      %vm252 = vcmask 130048
      %v254 = vsel %vm252, %v250, 0
      %v257 = vsel %vm252, %v251, 0
      %259 = vmatprep.subr.mxu0 0.0
      %260 = vmatpush1.msra.mxu0 %v248
      %261 = vmatprep.subr.mxu0 0.0
      %262 = vmatpush1.msra.mxu0 %v249
      %263 = vmatprep.subr.mxu0 0.0
      %264 = vmatpush1.msra.mxu0 0.0
      %265 = vmatprep.subr.mxu0 0.0
      %266 = vmatpush1.msra.mxu0 0.0
      %267 = vmatprep.subr.mxu0 0.0
      %268 = vmatpush1.msra.mxu0 0.0
      %269 = vmatprep.subr.mxu0 0.0
      %270 = vmatpush1.msra.mxu0 0.0
      %271 = vmatprep.subr.mxu0 0.0
      %272 = vmatpush1.msra.mxu0 0.0
      %273 = vmatprep.subr.mxu0 0.0
      %274 = vmatpush1.msra.mxu0 0.0
      %275 = vmatprep.subr.mxu0 0.0
      %276 = vmatpush1.msra.mxu0 0.0
      %277 = vmatprep.subr.mxu0 0.0
      %278 = vmatpush1.msra.mxu0 0.0
      %279 = vmatprep.subr.mxu0 0.0
      %280 = vmatpush1.msra.mxu0 0.0
      %281 = vmatprep.subr.mxu0 0.0
      %282 = vmatpush1.msra.mxu0 0.0
      %283 = vmatprep.subr.mxu0 0.0
      %284 = vmatpush1.msra.mxu0 0.0
      %285 = vmatprep.subr.mxu0 0.0
      %286 = vmatpush1.msra.mxu0 0.0
      %287 = vmatprep.subr.mxu0 0.0
      %288 = vmatpush1.msra.mxu0 0.0
      %289 = vmatprep.subr.mxu0 0.0
      %290 = vmatpush1.msra.mxu0 0.0
      %291 = vmatprep.subr.mxu0 0.0
      %292 = vmatpush1.msra.mxu0 0.0
      %293 = vmatprep.subr.mxu0 0.0
      %294 = vmatpush1.msra.mxu0 0.0
      %295 = vmatprep.subr.mxu0 0.0
      %296 = vmatpush1.msra.mxu0 0.0
      %297 = vmatprep.subr.mxu0 0.0
      %298 = vmatpush1.msra.mxu0 0.0
      %299 = vmatprep.subr.mxu0 0.0
      %300 = vmatpush1.msra.mxu0 0.0
      %301 = vmatprep.subr.mxu0 0.0
      %302 = vmatpush1.msra.mxu0 0.0
      %303 = vmatprep.subr.mxu0 0.0
      %304 = vmatpush1.msra.mxu0 0.0
      %305 = vmatprep.subr.mxu0 0.0
      %306 = vmatpush1.msra.mxu0 0.0
      %307 = vmatprep.subr.mxu0 0.0
      %308 = vmatpush1.msra.mxu0 0.0
      %309 = vmatprep.subr.mxu0 0.0
      %310 = vmatpush1.msra.mxu0 0.0
      %311 = vmatprep.subr.mxu0 0.0
      %312 = vmatpush1.msra.mxu0 0.0
      %313 = vmatprep.subr.mxu0 0.0
      %314 = vmatpush1.msra.mxu0 0.0
      %315 = vmatprep.subr.mxu0 0.0
      %316 = vmatpush1.msra.mxu0 0.0
      %317 = vmatprep.subr.mxu0 0.0
      %318 = vmatpush1.msra.mxu0 0.0
      %319 = vmatprep.subr.mxu0 0.0
      %320 = vmatpush1.msra.mxu0 0.0
      %321 = vmatprep.subr.mxu0 0.0
      %322 = vmatpush1.msra.mxu0 0.0
      %323 = vmatprep.mubr.f32.mxu0 0.0
      %324 = vmatmul.mubr.f32.gmra.mrb[0].mxu0 %v254
      %v325 = vpop.f32.mrb[0].mxu0
      %v326 = vadd.f32 0.0, %v325
      %v327 = vpop.f32.mrb[0].mxu0
      %328 = vmatprep.mubr.f32.mxu0 0.0
      %329 = vmatmul.mubr.f32.gmra.mrb[0].mxu0 %v257
      %v330 = vpop.f32.mrb[0].mxu0
      %v331 = vadd.f32 0.0, %v330
      %v332 = vpop.f32.mrb[0].mxu0
      %333 = vdwg.mxu0
      %v334 = vld [vmem:[%s239] sm:$0x1]
      %v336 = vlaneseq
      %v337 = vshrl.u32 %v336, 7
      %v338 = vsub.s32 0, %v337
      %v339 = vrot.slane %v334, %v338
      %v341 = vmul.f32 %v251, %v339
      %v342 = vsel %vm252, %v341, 0.0
      %343 = vadd.xlane.f32.xlu0 %v342
      %v344 = vpop.xlane.xlu0 %343
      %346 = vrot.lane.b32.xlu0 %v331, 127
      %v347 = vpop.permute.xlu0 %346
      %vm349 = vcmask 23552
      %v350 = vsel %vm349, %v347, %v344
      %v351 = vadd.f32 %v326, %v350
      %v352 = vld [vmem:[%s3] sm:$0xff]
      %354 = vset.pattern.permute.xlu0 0
      %355 = vperm.xlu0 %354, %v352
      %v356 = vpop.permute.xlu0 %355
      %v358 = vadd.f32 %v351, %v356
      %v359 = vmul.f32 %v358, 0.2
      %v360 = vmax.f32 %v358, %v359
      %vm361 = vcmask 31744
      %v362 = vsel %vm361, %v360, 0.0
      %363 = vadd.xlane.f32.xlu0 %v362
      %v364 = vpop.xlane.xlu0 %363
      %vm365 = vcmask 7168
      %366 = vst.msk [vmem:[%s247] sm:$0xff] %vm365, %v364
      %v367 = vmul.f32 %v360, %v360
      %v368 = vsel %vm361, %v367, 0.0
      %369 = vadd.xlane.f32.xlu0 %v368
      %v370 = vpop.xlane.xlu0 %369
      %vm371 = vcmask 15368
      %372 = vst.msk [vmem:[%s247] sm:$0xff] %vm371, %v370
      %p373 = scmp.lt.s32.totalorder %s19, 1
      %s374 = scalar_select %p373, %s19, 1
      %p375 = scmp.lt.s32.totalorder %s20, 0
      %s376 = scalar_select %p375, %s20, 0
      %s377 = sadd.s32 %s376, %s374
      %s378 = smul.addr %s377, 8
      %s379 = scalar_lea.vmem %s4, %s378
      // Predicated region
      $region37: #{_lambda_.2} parent=35 // pred_check
        %p380 = pneg %p145
      $region38: #{_lambda_.2} parent=35 // pred_check_branch
        %382 = sbr.rel (%p380) target = $region40
      $region39: #{_lambda_.2} parent=35 // pred_region
        _
      $region40: #{_lambda_.2} parent=35 // pred_fallthru
        _
    $region36: #{_lambda_.2} parent=5 // pred_fallthru
      _
    %p383 = scmp.le.s32.totalorder 2, %s10
    // Predicated region
    $region41: #{_lambda_.2} parent=5 // pred_check
      %p384 = pneg %p383
    $region42: #{_lambda_.2} parent=5 // pred_check_branch
      %386 = sbr.rel (%p384) target = $region44
    $region43: #{_lambda_.2} parent=5 // pred_region
      %s387 = ssub.s32 %s10, 2
      // Predicated region
      $region45: #{_lambda_.2} parent=43 // pred_check
        %p388 = pneg %p151
      $region46: #{_lambda_.2} parent=43 // pred_check_branch
        %390 = sbr.rel (%p388) target = $region48
      $region47: #{_lambda_.2} parent=43 // pred_region
        %p391 = scmp.lt.s32.totalorder %s21, 1
        %s392 = scalar_select %p391, %s21, 1
        %p393 = scmp.lt.s32.totalorder %s22, 0
        %s394 = scalar_select %p393, %s22, 0
        %s395 = sadd.s32 %s394, %s392
        %s396 = smul.addr %s395, 8
        %s397 = scalar_lea.vmem %s4, %s396
      $region48: #{_lambda_.2} parent=43 // pred_fallthru
        _
    $region44: #{_lambda_.2} parent=5 // pred_fallthru
      _
  $region6: #{_lambda_.2} parent=0 // loop_footer
    %s14 = sadd.s32 1, %s10
  $region7: #{_lambda_.2} parent=0 // loop_footer_branch
    %9 = sbr.rel target = $region3
  $region8: #{_lambda_.2} parent=0 // loop_exit
    _

</llo_original>
